<compile_context>
chip_gen: v5e
topology: v5e:2x2
jax: 0.10.0
libtpu: 0.0.40
codegen_flags: <defaults>
</compile_context>

<pallas_src>
import functools

import numpy as np
import jax
import jax.numpy as jnp
from jax.experimental import pallas as pl
from jax.experimental.pallas import tpu as pltpu


# ---------------------------------------------------------------------------
# Pallas kernel: fused  (z_mu @ W1 + b1) -> ReLU -> (@ W2 + b2)
# ---------------------------------------------------------------------------
def _decode_mean_kernel(zmu_ref, w1_ref, b1_ref, w2_ref, b2_ref, o_ref):
    # Layer 1: single K=(dim_z+dim_mu) contraction, bf16 operands, f32 acc.
    h = jnp.dot(zmu_ref[...], w1_ref[...], preferred_element_type=jnp.float32)
    h = jnp.maximum(h + b1_ref[...], 0.0)                    # bias + ReLU in f32
    # Layer 2: bf16 operands for the MXU, f32 accumulation.
    x = jnp.dot(h.astype(jnp.bfloat16), w2_ref[...],
                preferred_element_type=jnp.float32)
    o_ref[...] = x + b2_ref[...]                             # (tile_b, dim_x_p) f32


# ---------------------------------------------------------------------------
# One-time parameter preparation (NOT in the per-step hot path)
# ---------------------------------------------------------------------------
def prepare_params(w1, b1, w2, b2):
    """w1: (dim_in, 256) stored (in, out); b1: (256,); w2: (256, dim_x); b2: (dim_x,)."""
    hidden = w1.shape[-1]
    dim_x = w2.shape[-1]
    dim_x_p = pl.cdiv(dim_x, 128) * 128                      # lane-dense output

    w1_bf = w1.astype(jnp.bfloat16)                          # (dim_in, hidden)
    b1_2d = b1.reshape(1, hidden).astype(jnp.float32)        # (1, hidden)
    w2_p = (jnp.zeros((hidden, dim_x_p), jnp.bfloat16)
            .at[:, :dim_x].set(w2.astype(jnp.bfloat16)))     # (hidden, dim_x_p)
    b2_p = (jnp.zeros((1, dim_x_p), jnp.float32)
            .at[:, :dim_x].set(b2.astype(jnp.float32)))      # (1, dim_x_p)
    return (w1_bf, b1_2d, w2_p, b2_p, int(dim_x))


# ---------------------------------------------------------------------------
# Forward wrapper (hot path)
# ---------------------------------------------------------------------------
def decode_mean_net(mu, z, params, *, tile_b=None):
    """DecodeMeanNet forward.  mu: (B, dim_mu) f32, z: (B, dim_z) f32."""
    w1_bf, b1_2d, w2_p, b2_p, dim_x = params
    B = mu.shape[0]
    dim_z = z.shape[-1]
    dim_mu = mu.shape[-1]
    dim_in = dim_z + dim_mu
    hidden = w1_bf.shape[-1]
    dim_x_p = w2_p.shape[-1]
    assert w1_bf.shape[0] == dim_in

    # Default: a single grid step (single-TC chips).  On v7x pass
    # tile_b = round_up(cdiv(B, 2), 16) to split the batch across both cores.
    if tile_b is None:
        tile_b = max(16, ((B + 15) // 16) * 16)
    n_tiles = pl.cdiv(B, tile_b)
    Bp = n_tiles * tile_b

    # Concat [z, mu] + bf16 cast + batch pad for the activations; these tiny
    # ops fuse into one XLA op under jit (weights need no per-call work).
    z_mu = jnp.concatenate([z, mu], axis=-1).astype(jnp.bfloat16)
    if Bp != B:
        z_mu = jnp.pad(z_mu, ((0, Bp - B), (0, 0)))

    flops = 2 * Bp * (dim_in * hidden + hidden * dim_x_p)
    bytes_accessed = (z_mu.size * 2 + w1_bf.size * 2 + w2_p.size * 2
                      + 4 * (b1_2d.size + b2_p.size) + 4 * Bp * dim_x_p)

    out = pl.pallas_call(
        _decode_mean_kernel,
        out_shape=jax.ShapeDtypeStruct((Bp, dim_x_p), jnp.float32),
        grid_spec=pltpu.PrefetchScalarGridSpec(
            num_scalar_prefetch=0,
            grid=(n_tiles,),
            in_specs=[
                pl.BlockSpec((tile_b, dim_in), lambda i: (i, 0)),   # z_mu tile
                pl.BlockSpec((dim_in, hidden), lambda i: (0, 0)),   # W1 (resident)
                pl.BlockSpec((1, hidden), lambda i: (0, 0)),        # b1
                pl.BlockSpec((hidden, dim_x_p), lambda i: (0, 0)),  # W2 (padded)
                pl.BlockSpec((1, dim_x_p), lambda i: (0, 0)),       # b2 (padded)
            ],
            out_specs=pl.BlockSpec((tile_b, dim_x_p), lambda i: (i, 0)),
        ),
        compiler_params=pltpu.CompilerParams(
            dimension_semantics=("parallel",)),
        cost_estimate=pl.CostEstimate(
            flops=flops, transcendentals=0, bytes_accessed=bytes_accessed),
    )(z_mu, w1_bf, b1_2d, w2_p, b2_p)

    # Strip batch padding and the lane padding of the output features.
    return out[:B, :dim_x]


# ---------------------------------------------------------------------------
# Deterministic parameter init (synthetic; shapes from module __init__)
# ---------------------------------------------------------------------------
def init_params(key, dim_in, hidden, dim_x):
    k1, k2, k3, k4 = jax.random.split(key, 4)
    lim1 = 1.0 / np.sqrt(dim_in)
    lim2 = 1.0 / np.sqrt(hidden)
    w1 = jax.random.uniform(k1, (dim_in, hidden), jnp.float32, -lim1, lim1)
    b1 = jax.random.uniform(k2, (hidden,), jnp.float32, -lim1, lim1)
    w2 = jax.random.uniform(k3, (hidden, dim_x), jnp.float32, -lim2, lim2)
    b2 = jax.random.uniform(k4, (dim_x,), jnp.float32, -lim2, lim2)
    return w1, b1, w2, b2


def reference_forward(mu, z, w1, b1, w2, b2):
    """Pure-JAX reference matching the kernel's precision choices
    (bf16 operands, f32 accumulation)."""
    f32 = jnp.float32
    z_mu = jnp.concatenate([z, mu], axis=-1).astype(jnp.bfloat16).astype(f32)
    w1_b = w1.astype(jnp.bfloat16).astype(f32)
    w2_b = w2.astype(jnp.bfloat16).astype(f32)
    h = jnp.maximum(z_mu @ w1_b + b1, 0.0)
    h = h.astype(jnp.bfloat16).astype(f32)
    return h @ w2_b + b2


if __name__ == "__main__":
    # Config consistent with the module: shape_x=(4,4) -> dim_x=16,
    # dim_mu=32, dim_z=16, hidden=256 -> dim_in = 16 + 32 = 48.
    # B=100 is deliberately not a multiple of 16 to exercise batch padding;
    # with the default single-grid-step tiling it pads to 112 rows.
    B, dim_mu, dim_z, dim_x, hidden = 100, 32, 16, 16, 256
    dim_in = dim_z + dim_mu

    key = jax.random.PRNGKey(0)
    k_mu, k_z, k_p = jax.random.split(key, 3)
    mu = jax.random.normal(k_mu, (B, dim_mu), jnp.float32)
    z = jax.random.normal(k_z, (B, dim_z), jnp.float32)
    w1, b1, w2, b2 = init_params(k_p, dim_in, hidden, dim_x)

    # One-time weight prep (outside the per-step hot path).
    params = prepare_params(w1, b1, w2, b2)

    # Hot-path forward; params captured by closure so dim_x stays static.
    fwd = jax.jit(lambda mu_, z_: decode_mean_net(mu_, z_, params))

    out = jax.block_until_ready(fwd(mu, z))
    assert out.shape == (B, dim_x)

    ref = reference_forward(mu, z, w1, b1, w2, b2)
    np.testing.assert_allclose(np.asarray(out), np.asarray(ref),
                               rtol=1e-3, atol=1e-3)
    print("KERNEL_OK")
</pallas_src>

<mosaic_0001>
module attributes {stable_mosaic.version = 11 : i64} {
  func.func @_decode_mean_kernel(%arg0: i32, %arg1: memref<112x48xbf16, #tpu.memory_space<vmem>>, %arg2: memref<48x256xbf16, #tpu.memory_space<vmem>>, %arg3: memref<1x256xf32, #tpu.memory_space<vmem>>, %arg4: memref<256x128xbf16, #tpu.memory_space<vmem>>, %arg5: memref<1x128xf32, #tpu.memory_space<vmem>>, %arg6: memref<112x128xf32, #tpu.memory_space<vmem>>) attributes {dimension_semantics = [#tpu.dimension_semantics<parallel>], iteration_bounds = array<i64: 1>, scalar_prefetch = 0 : i64, scratch_operands = 0 : i64, tpu.core_type = #tpu.core_type<tc>, window_params = [{transform_indices = @transform_0, window_bounds = array<i64: 112, 48>}, {pipeline_mode = #tpu.pipeline_mode<synchronous>, transform_indices = @transform_1, window_bounds = array<i64: 48, 256>}, {pipeline_mode = #tpu.pipeline_mode<synchronous>, transform_indices = @transform_2, window_bounds = array<i64: 1, 256>}, {pipeline_mode = #tpu.pipeline_mode<synchronous>, transform_indices = @transform_3, window_bounds = array<i64: 256, 128>}, {pipeline_mode = #tpu.pipeline_mode<synchronous>, transform_indices = @transform_4, window_bounds = array<i64: 1, 128>}, {transform_indices = @transform_5, window_bounds = array<i64: 112, 128>}]} {
    %c0 = arith.constant 0 : index
    %c0_0 = arith.constant 0 : index
    %0 = vector.load %arg1[%c0, %c0_0] : memref<112x48xbf16, #tpu.memory_space<vmem>>, vector<112x48xbf16>
    %c0_1 = arith.constant 0 : index
    %c0_2 = arith.constant 0 : index
    %1 = vector.load %arg2[%c0_1, %c0_2] : memref<48x256xbf16, #tpu.memory_space<vmem>>, vector<48x256xbf16>
    %cst = arith.constant dense<0.000000e+00> : vector<112x256xf32>
    %2 = tpu.matmul %0, %1, %cst {dimension_numbers = #tpu.dot_dimension_numbers<[1], [0], [0], [1], [0, 0, 1, 1], [], []>} : vector<112x48xbf16>, vector<48x256xbf16>, vector<112x256xf32> -> vector<112x256xf32>
    %c0_3 = arith.constant 0 : index
    %c0_4 = arith.constant 0 : index
    %3 = vector.load %arg3[%c0_3, %c0_4] : memref<1x256xf32, #tpu.memory_space<vmem>>, vector<1x256xf32>
    %4 = vector.broadcast %3 : vector<1x256xf32> to vector<112x256xf32>
    %5 = arith.addf %2, %4 : vector<112x256xf32>
    %cst_5 = arith.constant 0.000000e+00 : f32
    %6 = vector.broadcast %cst_5 : f32 to vector<112x256xf32>
    %7 = arith.maximumf %5, %6 : vector<112x256xf32>
    %8 = arith.truncf %7 : vector<112x256xf32> to vector<112x256xbf16>
    %c0_6 = arith.constant 0 : index
    %c0_7 = arith.constant 0 : index
    %9 = vector.load %arg4[%c0_6, %c0_7] : memref<256x128xbf16, #tpu.memory_space<vmem>>, vector<256x128xbf16>
    %cst_8 = arith.constant dense<0.000000e+00> : vector<112x128xf32>
    %10 = tpu.matmul %8, %9, %cst_8 {dimension_numbers = #tpu.dot_dimension_numbers<[1], [0], [0], [1], [0, 0, 1, 1], [], []>} : vector<112x256xbf16>, vector<256x128xbf16>, vector<112x128xf32> -> vector<112x128xf32>
    %c0_9 = arith.constant 0 : index
    %c0_10 = arith.constant 0 : index
    %11 = vector.load %arg5[%c0_9, %c0_10] : memref<1x128xf32, #tpu.memory_space<vmem>>, vector<1x128xf32>
    %12 = vector.broadcast %11 : vector<1x128xf32> to vector<112x128xf32>
    %13 = arith.addf %10, %12 : vector<112x128xf32>
    %c0_11 = arith.constant 0 : index
    %c0_12 = arith.constant 0 : index
    %14 = vector.load %arg6[%c0_11, %c0_12] : memref<112x128xf32, #tpu.memory_space<vmem>>, vector<112x128xf32>
    tpu.vector_store %arg6[%c0_11, %c0_12], %13 {strides = array<i32>} : memref<112x128xf32, #tpu.memory_space<vmem>>, vector<112x128xf32>,
    return
  }
  func.func @transform_0(%arg0: i32) -> (i32, i32) {
    %c0_i32 = arith.constant 0 : i32
    %c0_i32_0 = arith.constant 0 : i32
    return %arg0, %c0_i32 : i32, i32
  }
  func.func @transform_1(%arg0: i32) -> (i32, i32) {
    %c0_i32 = arith.constant 0 : i32
    %c0_i32_0 = arith.constant 0 : i32
    %c0_i32_1 = arith.constant 0 : i32
    return %c0_i32, %c0_i32_0 : i32, i32
  }
  func.func @transform_2(%arg0: i32) -> (i32, i32) {
    %c0_i32 = arith.constant 0 : i32
    %c0_i32_0 = arith.constant 0 : i32
    %c0_i32_1 = arith.constant 0 : i32
    return %c0_i32, %c0_i32_0 : i32, i32
  }
  func.func @transform_3(%arg0: i32) -> (i32, i32) {
    %c0_i32 = arith.constant 0 : i32
    %c0_i32_0 = arith.constant 0 : i32
    %c0_i32_1 = arith.constant 0 : i32
    return %c0_i32, %c0_i32_0 : i32, i32
  }
  func.func @transform_4(%arg0: i32) -> (i32, i32) {
    %c0_i32 = arith.constant 0 : i32
    %c0_i32_0 = arith.constant 0 : i32
    %c0_i32_1 = arith.constant 0 : i32
    return %c0_i32, %c0_i32_0 : i32, i32
  }
  func.func @transform_5(%arg0: i32) -> (i32, i32) {
    %c0_i32 = arith.constant 0 : i32
    %c0_i32_0 = arith.constant 0 : i32
    return %arg0, %c0_i32 : i32, i32
  }
}

</mosaic_0001>

<llo_original>
// kernel: _lambda_.1
$region0: #{_lambda_.1}
  #allocation0 [shape = 'u32[]', space=smem, size = 0x4, offset = 0x4, fixed_abs, tag = 'smem constant byte address 0x4 - core index']
  #allocation1 [shape = 'u32[72,128]{1,0:T(1,128)}', space=vmem, size = 0x9000, scoped, tag = 'internal scratch']
  %s0 = inlined_call_operand.vmem [shape: bf16[112,48], index: 0, kind: input, shape index: {}]
  %s1 = inlined_call_operand.vmem [shape: bf16[48,256], index: 1, kind: input, shape index: {}]
  %s2 = inlined_call_operand.vmem [shape: f32[1,256], index: 2, kind: input, shape index: {}]
  %s3 = inlined_call_operand.vmem [shape: bf16[256,128], index: 3, kind: input, shape index: {}]
  %s4 = inlined_call_operand.vmem [shape: f32[1,128], index: 4, kind: input, shape index: {}]
  %s5 = inlined_call_operand.vmem [shape: f32[112,128], index: 5, kind: output, shape index: {}]
  %s6 = sld [smem:[#allocation0]]
  $region30: #{_lambda_.1} parent=0
    _
  %s8 = ssub.s32 1, %s6
  %s9 = scalar_select 0, %s8, %s6
  // Predicated region
  $region2: #{_lambda_.1} parent=0 // pred_check
    _
  $region3: #{_lambda_.1} parent=0 // pred_check_branch
    %11 = sbr.rel (0) target = $region5
  $region4: #{_lambda_.1} parent=0 // pred_region
    _
  $region5: #{_lambda_.1} parent=0 // pred_fallthru
    _
  // Predicated region
  $region6: #{_lambda_.1} parent=0 // pred_check
    _
  $region7: #{_lambda_.1} parent=0 // pred_check_branch
    %13 = sbr.rel (0) target = $region9
  $region8: #{_lambda_.1} parent=0 // pred_region
    _
  $region9: #{_lambda_.1} parent=0 // pred_fallthru
    _
  // Predicated region
  $region10: #{_lambda_.1} parent=0 // pred_check
    _
  $region11: #{_lambda_.1} parent=0 // pred_check_branch
    %15 = sbr.rel (0) target = $region13
  $region12: #{_lambda_.1} parent=0 // pred_region
    _
  $region13: #{_lambda_.1} parent=0 // pred_fallthru
    _
  // Predicated region
  $region14: #{_lambda_.1} parent=0 // pred_check
    _
  $region15: #{_lambda_.1} parent=0 // pred_check_branch
    %17 = sbr.rel (0) target = $region17
  $region16: #{_lambda_.1} parent=0 // pred_region
    _
  $region17: #{_lambda_.1} parent=0 // pred_fallthru
    _
  // Predicated region
  $region18: #{_lambda_.1} parent=0 // pred_check
    _
  $region19: #{_lambda_.1} parent=0 // pred_check_branch
    %19 = sbr.rel (0) target = $region21
  $region20: #{_lambda_.1} parent=0 // pred_region
    _
  $region21: #{_lambda_.1} parent=0 // pred_fallthru
    _
  %v21 = vld [vmem:[%s0] sm:$0xf]
  %v22 = vld [vmem:[%s0 + $0x4] sm:$0xf]
  %v23 = vld [vmem:[%s0 + $0x8] sm:$0xf]
  %v24 = vld [vmem:[%s0 + $0xc] sm:$0xf]
  %v25 = vld [vmem:[%s0 + $0x10] sm:$0xf]
  %v26 = vld [vmem:[%s0 + $0x14] sm:$0xf]
  %v27 = vld [vmem:[%s0 + $0x18] sm:$0xf]
  %v28 = vld [vmem:[%s0 + $0x1c] sm:$0xf]
  %v29 = vld [vmem:[%s0 + $0x20] sm:$0xf]
  %v30 = vld [vmem:[%s0 + $0x24] sm:$0xf]
  %v31 = vld [vmem:[%s0 + $0x28] sm:$0xf]
  %v32 = vld [vmem:[%s0 + $0x2c] sm:$0xf]
  %v33 = vld [vmem:[%s0 + $0x30] sm:$0xf]
  %v34 = vld [vmem:[%s0 + $0x34] sm:$0xf]
  %v35 = vld [vmem:[%s1] sm:$0xff]
  %v36 = vld [vmem:[%s1 + $0x8] sm:$0xff]
  %v37 = vld [vmem:[%s1 + $0x10] sm:$0xff]
  %v38 = vld [vmem:[%s1 + $0x18] sm:$0xff]
  %v39 = vld [vmem:[%s1 + $0x20] sm:$0xff]
  %v40 = vld [vmem:[%s1 + $0x28] sm:$0xff]
  %v41 = vld [vmem:[%s2] sm:$0x3]
  %v43 = vperm.slane %v41, 0
  %v44 = vperm.slane %v41, 1
  %v61 = vunpack.c.l.b16 %v21
  %v62 = vunpack.c.l.b16 %v22
  %v63 = vunpack.c.l.b16 %v23
  %v64 = vunpack.c.l.b16 %v24
  %v65 = vunpack.c.l.b16 %v25
  %v66 = vunpack.c.l.b16 %v26
  %v67 = vunpack.c.l.b16 %v27
  %v68 = vunpack.c.l.b16 %v28
  %v69 = vunpack.c.l.b16 %v29
  %v70 = vunpack.c.l.b16 %v30
  %v71 = vunpack.c.l.b16 %v31
  %v72 = vunpack.c.l.b16 %v32
  %v73 = vunpack.c.l.b16 %v33
  %v74 = vunpack.c.l.b16 %v34
  %v75 = vpack.c.b16 %v62, %v61
  %v76 = vpack.c.b16 %v64, %v63
  %v77 = vpack.c.b16 %v66, %v65
  %v78 = vpack.c.b16 %v68, %v67
  %v79 = vpack.c.b16 %v70, %v69
  %v80 = vpack.c.b16 %v72, %v71
  %v81 = vpack.c.b16 %v74, %v73
  %v88 = vunpack.c.l.b16 %v35
  %v89 = vunpack.c.h.b16 %v35
  %v90 = vunpack.c.l.b16 %v36
  %v91 = vunpack.c.h.b16 %v36
  %v92 = vunpack.c.l.b16 %v37
  %v93 = vunpack.c.h.b16 %v37
  %v94 = vunpack.c.l.b16 %v38
  %v95 = vunpack.c.h.b16 %v38
  %v96 = vunpack.c.l.b16 %v39
  %v97 = vunpack.c.h.b16 %v39
  %v98 = vunpack.c.l.b16 %v40
  %v99 = vunpack.c.h.b16 %v40
  %v100 = vpack.c.b16 %v90, %v88
  %v101 = vpack.c.b16 %v91, %v89
  %v102 = vpack.c.b16 %v94, %v92
  %v103 = vpack.c.b16 %v95, %v93
  %v104 = vpack.c.b16 %v98, %v96
  %v105 = vpack.c.b16 %v99, %v97
  %vm112 = vcmask 392192
  %v114 = vsel %vm112, %v75, 0
  %v117 = vsel %vm112, %v76, 0
  %v120 = vsel %vm112, %v77, 0
  %v123 = vsel %vm112, %v78, 0
  %v126 = vsel %vm112, %v79, 0
  %v129 = vsel %vm112, %v80, 0
  %v132 = vsel %vm112, %v81, 0
  %134 = vmatpush.bf16.msra.mxu0 0
  %135 = vmatpush.bf16.msra.mxu0 0
  %136 = vmatpush.bf16.msra.mxu0 0
  %137 = vmatpush.bf16.msra.mxu0 0
  %138 = vmatpush.bf16.msra.mxu0 0
  %139 = vmatpush.bf16.msra.mxu0 %v104
  %140 = vmatpush.bf16.msra.mxu0 %v102
  %141 = vmatpush.bf16.msra.mxu0 %v100
  %142 = vmatmul.bf16.gmra.mxu0 %v114
  %v143 = vpop.f32.mrf.mxu0
  %v144 = vadd.f32 %v43, %v143
  %v145 = vpop.f32.mrf.mxu0
  %v146 = vadd.f32 %v43, %v145
  %147 = vmatmul.bf16.gmra.mxu0 %v117
  %v148 = vpop.f32.mrf.mxu0
  %v149 = vadd.f32 %v43, %v148
  %v150 = vpop.f32.mrf.mxu0
  %v151 = vadd.f32 %v43, %v150
  %152 = vmatmul.bf16.gmra.mxu0 %v120
  %v153 = vpop.f32.mrf.mxu0
  %v154 = vadd.f32 %v43, %v153
  %v155 = vpop.f32.mrf.mxu0
  %v156 = vadd.f32 %v43, %v155
  %157 = vmatmul.bf16.gmra.mxu0 %v123
  %v158 = vpop.f32.mrf.mxu0
  %v159 = vadd.f32 %v43, %v158
  %v160 = vpop.f32.mrf.mxu0
  %v161 = vadd.f32 %v43, %v160
  %162 = vmatmul.bf16.gmra.mxu0 %v126
  %v163 = vpop.f32.mrf.mxu0
  %v164 = vadd.f32 %v43, %v163
  %v165 = vpop.f32.mrf.mxu0
  %v166 = vadd.f32 %v43, %v165
  %167 = vmatmul.bf16.gmra.mxu0 %v129
  %v168 = vpop.f32.mrf.mxu0
  %v169 = vadd.f32 %v43, %v168
  %v170 = vpop.f32.mrf.mxu0
  %v171 = vadd.f32 %v43, %v170
  %172 = vmatmul.bf16.gmra.mxu0 %v132
  %v173 = vpop.f32.mrf.mxu0
  %v174 = vadd.f32 %v43, %v173
  %v175 = vpop.f32.mrf.mxu0
  %v176 = vadd.f32 %v43, %v175
  %177 = vdwg.mxu0
  %178 = vmatpush.bf16.msra.mxu0 0
  %179 = vmatpush.bf16.msra.mxu0 0
  %180 = vmatpush.bf16.msra.mxu0 0
  %181 = vmatpush.bf16.msra.mxu0 0
  %182 = vmatpush.bf16.msra.mxu0 0
  %183 = vmatpush.bf16.msra.mxu0 %v105
  %184 = vmatpush.bf16.msra.mxu0 %v103
  %185 = vmatpush.bf16.msra.mxu0 %v101
  %186 = vmatmul.bf16.gmra.mxu0 %v114
  %v187 = vpop.f32.mrf.mxu0
  %v188 = vadd.f32 %v44, %v187
  %v189 = vpop.f32.mrf.mxu0
  %v190 = vadd.f32 %v44, %v189
  %191 = vmatmul.bf16.gmra.mxu0 %v117
  %v192 = vpop.f32.mrf.mxu0
  %v193 = vadd.f32 %v44, %v192
  %v194 = vpop.f32.mrf.mxu0
  %v195 = vadd.f32 %v44, %v194
  %196 = vmatmul.bf16.gmra.mxu0 %v120
  %v197 = vpop.f32.mrf.mxu0
  %v198 = vadd.f32 %v44, %v197
  %v199 = vpop.f32.mrf.mxu0
  %v200 = vadd.f32 %v44, %v199
  %201 = vmatmul.bf16.gmra.mxu0 %v123
  %v202 = vpop.f32.mrf.mxu0
  %v203 = vadd.f32 %v44, %v202
  %v204 = vpop.f32.mrf.mxu0
  %v205 = vadd.f32 %v44, %v204
  %206 = vmatmul.bf16.gmra.mxu0 %v126
  %v207 = vpop.f32.mrf.mxu0
  %v208 = vadd.f32 %v44, %v207
  %v209 = vpop.f32.mrf.mxu0
  %v210 = vadd.f32 %v44, %v209
  %211 = vmatmul.bf16.gmra.mxu0 %v129
  %v212 = vpop.f32.mrf.mxu0
  %v213 = vadd.f32 %v44, %v212
  %v214 = vpop.f32.mrf.mxu0
  %v215 = vadd.f32 %v44, %v214
  %216 = vmatmul.bf16.gmra.mxu0 %v132
  %v217 = vpop.f32.mrf.mxu0
  %v218 = vadd.f32 %v44, %v217
  %v219 = vpop.f32.mrf.mxu0
  %v220 = vadd.f32 %v44, %v219
  %221 = vdwg.mxu0
  %v222 = vmax.f32 %v144, 0.0
  %v223 = vmax.f32 %v188, 0.0
  %v224 = vmax.f32 %v146, 0.0
  %v225 = vmax.f32 %v190, 0.0
  %v226 = vmax.f32 %v149, 0.0
  %v227 = vmax.f32 %v193, 0.0
  %v228 = vmax.f32 %v151, 0.0
  %v229 = vmax.f32 %v195, 0.0
  %v230 = vmax.f32 %v154, 0.0
  %v231 = vmax.f32 %v198, 0.0
  %v232 = vmax.f32 %v156, 0.0
  %v233 = vmax.f32 %v200, 0.0
  %v234 = vmax.f32 %v159, 0.0
  %v235 = vmax.f32 %v203, 0.0
  %v236 = vmax.f32 %v161, 0.0
  %v237 = vmax.f32 %v205, 0.0
  %v238 = vmax.f32 %v164, 0.0
  %v239 = vmax.f32 %v208, 0.0
  %v240 = vmax.f32 %v166, 0.0
  %v241 = vmax.f32 %v210, 0.0
  %v242 = vmax.f32 %v169, 0.0
  %v243 = vmax.f32 %v213, 0.0
  %v244 = vmax.f32 %v171, 0.0
  %v245 = vmax.f32 %v215, 0.0
  %v246 = vmax.f32 %v174, 0.0
  %v247 = vmax.f32 %v218, 0.0
  %v248 = vmax.f32 %v176, 0.0
  %v249 = vmax.f32 %v220, 0.0
  %v250 = vpack.c.bf16 %v224, %v222
  %v251 = vpack.c.bf16 %v225, %v223
  %v252 = vpack.c.bf16 %v228, %v226
  %v253 = vpack.c.bf16 %v229, %v227
  %v254 = vpack.c.bf16 %v232, %v230
  %v255 = vpack.c.bf16 %v233, %v231
  %v256 = vpack.c.bf16 %v236, %v234
  %v257 = vpack.c.bf16 %v237, %v235
  %v258 = vpack.c.bf16 %v240, %v238
  %v259 = vpack.c.bf16 %v241, %v239
  %v260 = vpack.c.bf16 %v244, %v242
  %v261 = vpack.c.bf16 %v245, %v243
  %v262 = vpack.c.bf16 %v248, %v246
  %v263 = vpack.c.bf16 %v249, %v247
  %v264 = vld [vmem:[%s3] sm:$0xf]
  %v265 = vld [vmem:[%s3 + $0x4] sm:$0xf]
  %v266 = vld [vmem:[%s3 + $0x8] sm:$0xf]
  %v267 = vld [vmem:[%s3 + $0xc] sm:$0xf]
  %v268 = vld [vmem:[%s3 + $0x10] sm:$0xf]
  %v269 = vld [vmem:[%s3 + $0x14] sm:$0xf]
  %v270 = vld [vmem:[%s3 + $0x18] sm:$0xf]
  %v271 = vld [vmem:[%s3 + $0x1c] sm:$0xf]
  %v272 = vld [vmem:[%s3 + $0x20] sm:$0xf]
  %v273 = vld [vmem:[%s3 + $0x24] sm:$0xf]
  %v274 = vld [vmem:[%s3 + $0x28] sm:$0xf]
  %v275 = vld [vmem:[%s3 + $0x2c] sm:$0xf]
  %v276 = vld [vmem:[%s3 + $0x30] sm:$0xf]
  %v277 = vld [vmem:[%s3 + $0x34] sm:$0xf]
  %v278 = vld [vmem:[%s3 + $0x38] sm:$0xf]
  %v279 = vld [vmem:[%s3 + $0x3c] sm:$0xf]
  %v280 = vld [vmem:[%s3 + $0x40] sm:$0xf]
  %v281 = vld [vmem:[%s3 + $0x44] sm:$0xf]
  %v282 = vld [vmem:[%s3 + $0x48] sm:$0xf]
  %v283 = vld [vmem:[%s3 + $0x4c] sm:$0xf]
  %v284 = vld [vmem:[%s3 + $0x50] sm:$0xf]
  %v285 = vld [vmem:[%s3 + $0x54] sm:$0xf]
  %v286 = vld [vmem:[%s3 + $0x58] sm:$0xf]
  %v287 = vld [vmem:[%s3 + $0x5c] sm:$0xf]
  %v288 = vld [vmem:[%s3 + $0x60] sm:$0xf]
  %v289 = vld [vmem:[%s3 + $0x64] sm:$0xf]
  %v290 = vld [vmem:[%s3 + $0x68] sm:$0xf]
  %v291 = vld [vmem:[%s3 + $0x6c] sm:$0xf]
  %v292 = vld [vmem:[%s3 + $0x70] sm:$0xf]
  %v293 = vld [vmem:[%s3 + $0x74] sm:$0xf]
  %v294 = vld [vmem:[%s3 + $0x78] sm:$0xf]
  %v295 = vld [vmem:[%s3 + $0x7c] sm:$0xf]
  %v296 = vld [vmem:[%s4] sm:$0x1]
  %v298 = vperm.slane %v296, 0
  %v332 = vunpack.c.l.b16 %v264
  %v333 = vunpack.c.l.b16 %v265
  %v334 = vunpack.c.l.b16 %v266
  %v335 = vunpack.c.l.b16 %v267
  %v336 = vunpack.c.l.b16 %v268
  %v337 = vunpack.c.l.b16 %v269
  %v338 = vunpack.c.l.b16 %v270
  %v339 = vunpack.c.l.b16 %v271
  %v340 = vunpack.c.l.b16 %v272
  %v341 = vunpack.c.l.b16 %v273
  %v342 = vunpack.c.l.b16 %v274
  %v343 = vunpack.c.l.b16 %v275
  %v344 = vunpack.c.l.b16 %v276
  %v345 = vunpack.c.l.b16 %v277
  %v346 = vunpack.c.l.b16 %v278
  %v347 = vunpack.c.l.b16 %v279
  %v348 = vunpack.c.l.b16 %v280
  %v349 = vunpack.c.l.b16 %v281
  %v350 = vunpack.c.l.b16 %v282
  %v351 = vunpack.c.l.b16 %v283
  %v352 = vunpack.c.l.b16 %v284
  %v353 = vunpack.c.l.b16 %v285
  %v354 = vunpack.c.l.b16 %v286
  %v355 = vunpack.c.l.b16 %v287
  %v356 = vunpack.c.l.b16 %v288
  %v357 = vunpack.c.l.b16 %v289
  %v358 = vunpack.c.l.b16 %v290
  %v359 = vunpack.c.l.b16 %v291
  %v360 = vunpack.c.l.b16 %v292
  %v361 = vunpack.c.l.b16 %v293
  %v362 = vunpack.c.l.b16 %v294
  %v363 = vunpack.c.l.b16 %v295
  %v364 = vpack.c.b16 %v333, %v332
  %v365 = vpack.c.b16 %v335, %v334
  %v366 = vpack.c.b16 %v337, %v336
  %v367 = vpack.c.b16 %v339, %v338
  %v368 = vpack.c.b16 %v341, %v340
  %v369 = vpack.c.b16 %v343, %v342
  %v370 = vpack.c.b16 %v345, %v344
  %v371 = vpack.c.b16 %v347, %v346
  %v372 = vpack.c.b16 %v349, %v348
  %v373 = vpack.c.b16 %v351, %v350
  %v374 = vpack.c.b16 %v353, %v352
  %v375 = vpack.c.b16 %v355, %v354
  %v376 = vpack.c.b16 %v357, %v356
  %v377 = vpack.c.b16 %v359, %v358
  %v378 = vpack.c.b16 %v361, %v360
  %v379 = vpack.c.b16 %v363, %v362
  %396 = vmatpush.bf16.msra.mxu0 %v371
  %397 = vmatpush.bf16.msra.mxu0 %v370
  %398 = vmatpush.bf16.msra.mxu0 %v369
  %399 = vmatpush.bf16.msra.mxu0 %v368
  %400 = vmatpush.bf16.msra.mxu0 %v367
  %401 = vmatpush.bf16.msra.mxu0 %v366
  %402 = vmatpush.bf16.msra.mxu0 %v365
  %403 = vmatpush.bf16.msra.mxu0 %v364
  %404 = vmatmul.bf16.gmra.mxu0 %v250
  %v405 = vpop.f32.mrf.mxu0
  %v406 = vadd.f32 %v298, %v405
  %v407 = vpop.f32.mrf.mxu0
  %v408 = vadd.f32 %v298, %v407
  %409 = vmatmul.bf16.gmra.mxu0 %v252
  %v410 = vpop.f32.mrf.mxu0
  %v411 = vadd.f32 %v298, %v410
  %v412 = vpop.f32.mrf.mxu0
  %v413 = vadd.f32 %v298, %v412
  %414 = vmatmul.bf16.gmra.mxu0 %v254
  %v415 = vpop.f32.mrf.mxu0
  %v416 = vadd.f32 %v298, %v415
  %v417 = vpop.f32.mrf.mxu0
  %v418 = vadd.f32 %v298, %v417
  %419 = vmatmul.bf16.gmra.mxu0 %v256
  %v420 = vpop.f32.mrf.mxu0
  %v421 = vadd.f32 %v298, %v420
  %v422 = vpop.f32.mrf.mxu0
  %v423 = vadd.f32 %v298, %v422
  %424 = vmatmul.bf16.gmra.mxu0 %v258
  %v425 = vpop.f32.mrf.mxu0
  %v426 = vadd.f32 %v298, %v425
  %v427 = vpop.f32.mrf.mxu0
  %v428 = vadd.f32 %v298, %v427
  %429 = vmatmul.bf16.gmra.mxu0 %v260
  %v430 = vpop.f32.mrf.mxu0
  %v431 = vadd.f32 %v298, %v430
  %v432 = vpop.f32.mrf.mxu0
  %v433 = vadd.f32 %v298, %v432
  %434 = vmatmul.bf16.gmra.mxu0 %v262
  %v435 = vpop.f32.mrf.mxu0
  %v436 = vadd.f32 %v298, %v435
  %v437 = vpop.f32.mrf.mxu0
  %v438 = vadd.f32 %v298, %v437
  %439 = vdwg.mxu0
  %440 = vmatpush.bf16.msra.mxu0 %v379
  %441 = vmatpush.bf16.msra.mxu0 %v378
  %442 = vmatpush.bf16.msra.mxu0 %v377
  %443 = vmatpush.bf16.msra.mxu0 %v376
  %444 = vmatpush.bf16.msra.mxu0 %v375
  %445 = vmatpush.bf16.msra.mxu0 %v374
  %446 = vmatpush.bf16.msra.mxu0 %v373
  %447 = vmatpush.bf16.msra.mxu0 %v372
  %448 = vmatmul.bf16.gmra.mxu0 %v251
  %v449 = vpop.f32.mrf.mxu0
  %v450 = vadd.f32 %v406, %v449
  %v451 = vpop.f32.mrf.mxu0
  %v452 = vadd.f32 %v408, %v451
  %453 = vmatmul.bf16.gmra.mxu0 %v253
  %v454 = vpop.f32.mrf.mxu0
  %v455 = vadd.f32 %v411, %v454
  %v456 = vpop.f32.mrf.mxu0
  %v457 = vadd.f32 %v413, %v456
  %458 = vmatmul.bf16.gmra.mxu0 %v255
  %v459 = vpop.f32.mrf.mxu0
  %v460 = vadd.f32 %v416, %v459
  %v461 = vpop.f32.mrf.mxu0
  %v462 = vadd.f32 %v418, %v461
  %463 = vmatmul.bf16.gmra.mxu0 %v257
  %v464 = vpop.f32.mrf.mxu0
  %v465 = vadd.f32 %v421, %v464
  %v466 = vpop.f32.mrf.mxu0
  %v467 = vadd.f32 %v423, %v466
  %468 = vmatmul.bf16.gmra.mxu0 %v259
  %v469 = vpop.f32.mrf.mxu0
  %v470 = vadd.f32 %v426, %v469
  %v471 = vpop.f32.mrf.mxu0
  %v472 = vadd.f32 %v428, %v471
  %473 = vmatmul.bf16.gmra.mxu0 %v261
  %v474 = vpop.f32.mrf.mxu0
  %v475 = vadd.f32 %v431, %v474
  %v476 = vpop.f32.mrf.mxu0
  %v477 = vadd.f32 %v433, %v476
  %478 = vmatmul.bf16.gmra.mxu0 %v263
  %v479 = vpop.f32.mrf.mxu0
  %v480 = vadd.f32 %v436, %v479
  %v481 = vpop.f32.mrf.mxu0
  %v482 = vadd.f32 %v438, %v481
  %483 = vdwg.mxu0
  %484 = vst [vmem:[%s5] sm:$0xff] %v450
  %485 = vst [vmem:[%s5 + $0x8] sm:$0xff] %v452
  %486 = vst [vmem:[%s5 + $0x10] sm:$0xff] %v455
  %487 = vst [vmem:[%s5 + $0x18] sm:$0xff] %v457
  %488 = vst [vmem:[%s5 + $0x20] sm:$0xff] %v460
  %489 = vst [vmem:[%s5 + $0x28] sm:$0xff] %v462
  %490 = vst [vmem:[%s5 + $0x30] sm:$0xff] %v465
  %491 = vst [vmem:[%s5 + $0x38] sm:$0xff] %v467
  %492 = vst [vmem:[%s5 + $0x40] sm:$0xff] %v470
  %493 = vst [vmem:[%s5 + $0x48] sm:$0xff] %v472
  %494 = vst [vmem:[%s5 + $0x50] sm:$0xff] %v475
  %495 = vst [vmem:[%s5 + $0x58] sm:$0xff] %v477
  %496 = vst [vmem:[%s5 + $0x60] sm:$0xff] %v480
  %497 = vst [vmem:[%s5 + $0x68] sm:$0xff] %v482
  // Predicated region
  $region22: #{_lambda_.1} parent=0 // pred_check
    _
  $region23: #{_lambda_.1} parent=0 // pred_check_branch
    %499 = sbr.rel (0) target = $region25
  $region24: #{_lambda_.1} parent=0 // pred_region
    _
  $region25: #{_lambda_.1} parent=0 // pred_fallthru
    _
  // Predicated region
  $region26: #{_lambda_.1} parent=0 // pred_check
    _
  $region27: #{_lambda_.1} parent=0 // pred_check_branch
    %501 = sbr.rel (0) target = $region29
  $region28: #{_lambda_.1} parent=0 // pred_region
    _
  $region29: #{_lambda_.1} parent=0 // pred_fallthru
    _

</llo_original>
